<compile_context>
chip_gen: v7x
topology: tpu7x:2x2x1
jax: 0.10.0
libtpu: 0.0.40
codegen_flags: <defaults>
</compile_context>

<pallas_src>
import functools

import numpy as np
import jax
import jax.numpy as jnp
from jax.experimental import pallas as pl
from jax.experimental.pallas import tpu as pltpu


# ----------------------------------------------------------------------------
# Pallas kernel: one batch element per grid step.
#   out[o, p] = pw_b[o] + sum_c pw_w[o,c] *
#               ( X[c, p] + dw_b[c]
#                 + sum_{kh,kw} dw_w[c,kh,kw] * relu(X)[c, p + (kh-pad)*W + (kw-pad)] )
# with zero "same" padding on the relu'd input.
# ----------------------------------------------------------------------------
def _dsconv_res_kernel(x_ref, dww_ref, dwb_ref, pww_ref, pwb_ref, out_ref,
                       pad_ref, *, C, C_OUT, H, W, K, OFF):
    # x_ref   : (1, C, H*W)        VMEM   raw input (lane-dense, flattened spatial)
    # dww_ref : (C, K*K)           VMEM   depthwise weights
    # dwb_ref : (C, 1)             VMEM   depthwise bias
    # pww_ref : (C_OUT, C)         VMEM   pointwise weights
    # pwb_ref : (C_OUT, 1)         VMEM   pointwise bias
    # out_ref : (1, C_OUT, H*W)    VMEM
    # pad_ref : (C, OFF + H*W + E) VMEM scratch; E = pad*W + pad, OFF = 128-aligned
    HW = H * W
    pad = K // 2

    x = x_ref[0]                                     # (C, HW) raw input (residual)

    # --- zero-padded ReLU(x), flattened: pad_ref[c, OFF + p] = relu(x)[c, p] ---
    # (interior store at a 128-aligned lane offset -> unmasked, aligned stores)
    pad_ref[...] = jnp.zeros_like(pad_ref)
    pad_ref[:, OFF:OFF + HW] = jnp.maximum(x, 0.0)

    # --- column validity masks (horizontal zero padding).  Vertical padding is
    #     already provided by the zero margins of pad_ref. ----------------------
    col_ok = {}
    if K > 1:
        lane = jax.lax.broadcasted_iota(jnp.int32, (C, HW), 1)
        if (W & (W - 1)) == 0:                       # W power of two: cheap mod
            col = jnp.bitwise_and(lane, W - 1)
        else:
            col = jax.lax.rem(lane, jnp.int32(W))
        for kw in range(K):
            dw = kw - pad
            if dw != 0:
                col_ok[kw] = jnp.logical_and(col >= -dw, col < W - dw)

    # --- depthwise KxK conv on ReLU(x) + depthwise bias + residual (raw x) -----
    acc = x + dwb_ref[...]                           # (C, HW)
    for kh in range(K):
        for kw in range(K):
            t = kh * K + kw
            s = OFF + (kh - pad) * W + (kw - pad)    # static lane offset, >= 0
            win = pad_ref[:, s:s + HW]               # (C, HW)
            if kw != pad:                            # mask wrapped columns
                win = jnp.where(col_ok[kw], win, 0.0)
            acc = acc + win * dww_ref[:, t:t + 1]    # per-channel scalar weight

    # --- pointwise 1x1 conv (channel mixing) + bias ----------------------------
    # TODO(synk): for larger channel counts (C >= ~32) or bf16 activations,
    # replace this rank-1 accumulation with a single MXU matmul:
    #   out = jnp.dot(pww_ref[...], acc, preferred_element_type=jnp.float32)
    out = jnp.zeros((C_OUT, HW), jnp.float32) + pwb_ref[...]
    for c in range(C):
        out = out + pww_ref[:, c:c + 1] * acc[c:c + 1, :]
    out_ref[0] = out


def depthsep_residual_pallas(x, dw_w, dw_b, pw_w, pw_b):
    """pointwise( depthwise( ReLU(x) ) + dw_bias + x ) + pw_bias  (NCHW, f32)."""
    B, C, H, W = x.shape
    K = dw_w.shape[-1]
    C_OUT = pw_w.shape[0]
    HW = H * W
    pad = K // 2
    E = pad * W + pad                       # flat half-padding width
    OFF = ((E + 127) // 128) * 128          # 128-aligned start of the interior
    PADW = OFF + HW + E                     # scratch row length

    # Glue: flatten spatial (free bitcast) + weight reshapes stay in plain JAX.
    x_flat = x.reshape(B, C, HW).astype(jnp.float32)
    dww = dw_w.reshape(C, K * K).astype(jnp.float32)
    dwb = dw_b.reshape(C, 1).astype(jnp.float32)
    pww = pw_w.reshape(C_OUT, C).astype(jnp.float32)
    pwb = pw_b.reshape(C_OUT, 1).astype(jnp.float32)

    kernel = functools.partial(_dsconv_res_kernel,
                               C=C, C_OUT=C_OUT, H=H, W=W, K=K, OFF=OFF)

    flops = B * HW * (C * (2 * K * K + 2) + C_OUT * (2 * C + 1))
    bytes_accessed = 4 * (B * C * HW + B * C_OUT * HW
                          + C * K * K + C + C_OUT * C + C_OUT)

    out_flat = pl.pallas_call(
        kernel,
        out_shape=jax.ShapeDtypeStruct((B, C_OUT, HW), jnp.float32),
        grid=(B,),
        in_specs=[
            pl.BlockSpec((1, C, HW), lambda b: (b, 0, 0)),
            pl.BlockSpec((C, K * K), lambda b: (0, 0)),
            pl.BlockSpec((C, 1), lambda b: (0, 0)),
            pl.BlockSpec((C_OUT, C), lambda b: (0, 0)),
            pl.BlockSpec((C_OUT, 1), lambda b: (0, 0)),
        ],
        out_specs=pl.BlockSpec((1, C_OUT, HW), lambda b: (b, 0, 0)),
        scratch_shapes=[pltpu.VMEM((C, PADW), jnp.float32)],
        compiler_params=pltpu.CompilerParams(
            dimension_semantics=("parallel",)),      # batch has no carry -> megacore
        cost_estimate=pl.CostEstimate(flops=flops, transcendentals=0,
                                      bytes_accessed=bytes_accessed),
    )(x_flat, dww, dwb, pww, pwb)

    return out_flat.reshape(B, C_OUT, H, W)


def res_conv_block_forward(X, params):
    """ResConvBlock.forward (Norm=Identity, Padder=None, activation=ReLU).

    The original forward computes conv1(ReLU(X)) and immediately discards it
    (norm2/conv2 read X), so conv1 is dead code and is not executed (feedback #1).
    """
    return depthsep_residual_pallas(
        X,
        params["c2_dw_w"], params["c2_dw_b"],
        params["c2_pw_w"], params["c2_pw_b"])


# ----------------------------------------------------------------------------
# Pure-JAX reference (lax conv) for correctness checking.
# ----------------------------------------------------------------------------
def _conv2d_ref(x, w, b, *, groups=1, padding=0):
    y = jax.lax.conv_general_dilated(
        x, w, window_strides=(1, 1),
        padding=[(padding, padding), (padding, padding)],
        dimension_numbers=("NCHW", "OIHW", "NCHW"),
        feature_group_count=groups)
    return y + b[None, :, None, None]


def res_conv_block_ref(X, p):
    C = X.shape[1]
    K = p["c2_dw_w"].shape[2]
    pad = K // 2
    relu = jax.nn.relu
    # conv1 is dead in the original module -> has no effect on the output.
    out = _conv2d_ref(relu(X), p["c2_dw_w"], p["c2_dw_b"], groups=C, padding=pad)
    out = out + X
    out = _conv2d_ref(out, p["c2_pw_w"], p["c2_pw_b"], padding=0)
    return out


if __name__ == "__main__":
    B, C_IN, C_OUT, H, W, K = 2, 4, 8, 16, 16, 5

    key = jax.random.PRNGKey(0)
    ks = jax.random.split(key, 9)
    X = jax.random.normal(ks[0], (B, C_IN, H, W), jnp.float32)

    params = {
        # conv1 = DepthSepConv(C_IN -> C_IN, k=5): parameters exist in the module
        # but its output is discarded by forward(), so they are never used.
        "c1_dw_w": 0.1 * jax.random.normal(ks[1], (C_IN, 1, K, K), jnp.float32),
        "c1_dw_b": 0.1 * jax.random.normal(ks[2], (C_IN,), jnp.float32),
        "c1_pw_w": 0.1 * jax.random.normal(ks[3], (C_IN, C_IN, 1, 1), jnp.float32),
        "c1_pw_b": 0.1 * jax.random.normal(ks[4], (C_IN,), jnp.float32),
        # conv2_depthwise (C_IN -> C_IN, groups=C_IN) + conv2_pointwise (C_IN -> C_OUT)
        "c2_dw_w": 0.1 * jax.random.normal(ks[5], (C_IN, 1, K, K), jnp.float32),
        "c2_dw_b": 0.1 * jax.random.normal(ks[6], (C_IN,), jnp.float32),
        "c2_pw_w": 0.1 * jax.random.normal(ks[7], (C_OUT, C_IN, 1, 1), jnp.float32),
        "c2_pw_b": 0.1 * jax.random.normal(ks[8], (C_OUT,), jnp.float32),
    }

    fwd = jax.jit(res_conv_block_forward)
    out = jax.block_until_ready(fwd(X, params))

    ref = jax.block_until_ready(res_conv_block_ref(X, params))
    np.testing.assert_allclose(np.asarray(out), np.asarray(ref),
                               rtol=1e-4, atol=1e-4)
    assert out.shape == (B, C_OUT, H, W) and out.dtype == jnp.float32

    print("KERNEL_OK")
</pallas_src>

<mosaic_0001>
module attributes {stable_mosaic.version = 11 : i64} {
  func.func @_dsconv_res_kernel(%arg0: i32, %arg1: memref<1x4x256xf32, #tpu.memory_space<vmem>>, %arg2: memref<4x25xf32, #tpu.memory_space<vmem>>, %arg3: memref<4x1xf32, #tpu.memory_space<vmem>>, %arg4: memref<8x4xf32, #tpu.memory_space<vmem>>, %arg5: memref<8x1xf32, #tpu.memory_space<vmem>>, %arg6: memref<1x8x256xf32, #tpu.memory_space<vmem>>, %arg7: memref<4x418xf32, #tpu.memory_space<vmem>>) attributes {dimension_semantics = [#tpu.dimension_semantics<parallel>], iteration_bounds = array<i64: 2>, scalar_prefetch = 0 : i64, scratch_operands = 1 : i64, tpu.core_type = #tpu.core_type<tc>, window_params = [{transform_indices = @transform_0, window_bounds = array<i64: 1, 4, 256>}, {pipeline_mode = #tpu.pipeline_mode<synchronous>, transform_indices = @transform_1, window_bounds = array<i64: 4, 25>}, {pipeline_mode = #tpu.pipeline_mode<synchronous>, transform_indices = @transform_2, window_bounds = array<i64: 4, 1>}, {pipeline_mode = #tpu.pipeline_mode<synchronous>, transform_indices = @transform_3, window_bounds = array<i64: 8, 4>}, {pipeline_mode = #tpu.pipeline_mode<synchronous>, transform_indices = @transform_4, window_bounds = array<i64: 8, 1>}, {transform_indices = @transform_5, window_bounds = array<i64: 1, 8, 256>}]} {
    %c0 = arith.constant 0 : index
    %c0_0 = arith.constant 0 : index
    %c0_1 = arith.constant 0 : index
    %0 = vector.load %arg1[%c0, %c0_0, %c0_1] : memref<1x4x256xf32, #tpu.memory_space<vmem>>, vector<1x4x256xf32>
    %1 = vector.shape_cast %0 : vector<1x4x256xf32> to vector<4x256xf32>
    %cst = arith.constant 0.000000e+00 : f32
    %2 = vector.broadcast %cst : f32 to vector<4x418xf32>
    %c0_2 = arith.constant 0 : index
    %c0_3 = arith.constant 0 : index
    %3 = vector.load %arg7[%c0_2, %c0_3] : memref<4x418xf32, #tpu.memory_space<vmem>>, vector<4x418xf32>
    tpu.vector_store %arg7[%c0_2, %c0_3], %2 {strides = array<i32>} : memref<4x418xf32, #tpu.memory_space<vmem>>, vector<4x418xf32>,
    %cst_4 = arith.constant 0.000000e+00 : f32
    %4 = vector.broadcast %cst_4 : f32 to vector<4x256xf32>
    %5 = arith.maximumf %1, %4 : vector<4x256xf32>
    %c0_5 = arith.constant 0 : index
    %c128 = arith.constant 128 : index
    %6 = vector.load %arg7[%c0_5, %c128] : memref<4x418xf32, #tpu.memory_space<vmem>>, vector<4x256xf32>
    tpu.vector_store %arg7[%c0_5, %c128], %5 {strides = array<i32>} : memref<4x418xf32, #tpu.memory_space<vmem>>, vector<4x256xf32>,
    %7 = tpu.iota {dimensions = array<i32: 1>} : vector<4x256xi32>
    %c15_i32 = arith.constant 15 : i32
    %8 = vector.broadcast %c15_i32 : i32 to vector<4x256xi32>
    %9 = arith.andi %7, %8 : vector<4x256xi32>
    %c2_i32 = arith.constant 2 : i32
    %10 = vector.broadcast %c2_i32 : i32 to vector<4x256xi32>
    %11 = arith.cmpi sge, %9, %10 : vector<4x256xi32>
    %c18_i32 = arith.constant 18 : i32
    %12 = vector.broadcast %c18_i32 : i32 to vector<4x256xi32>
    %13 = arith.cmpi slt, %9, %12 : vector<4x256xi32>
    %14 = arith.andi %11, %13 : vector<4x256xi1>
    %c1_i32 = arith.constant 1 : i32
    %15 = vector.broadcast %c1_i32 : i32 to vector<4x256xi32>
    %16 = arith.cmpi sge, %9, %15 : vector<4x256xi32>
    %c17_i32 = arith.constant 17 : i32
    %17 = vector.broadcast %c17_i32 : i32 to vector<4x256xi32>
    %18 = arith.cmpi slt, %9, %17 : vector<4x256xi32>
    %19 = arith.andi %16, %18 : vector<4x256xi1>
    %c-1_i32 = arith.constant -1 : i32
    %20 = vector.broadcast %c-1_i32 : i32 to vector<4x256xi32>
    %21 = arith.cmpi sge, %9, %20 : vector<4x256xi32>
    %c15_i32_6 = arith.constant 15 : i32
    %22 = vector.broadcast %c15_i32_6 : i32 to vector<4x256xi32>
    %23 = arith.cmpi slt, %9, %22 : vector<4x256xi32>
    %24 = arith.andi %21, %23 : vector<4x256xi1>
    %c-2_i32 = arith.constant -2 : i32
    %25 = vector.broadcast %c-2_i32 : i32 to vector<4x256xi32>
    %26 = arith.cmpi sge, %9, %25 : vector<4x256xi32>
    %c14_i32 = arith.constant 14 : i32
    %27 = vector.broadcast %c14_i32 : i32 to vector<4x256xi32>
    %28 = arith.cmpi slt, %9, %27 : vector<4x256xi32>
    %29 = arith.andi %26, %28 : vector<4x256xi1>
    %c0_7 = arith.constant 0 : index
    %c0_8 = arith.constant 0 : index
    %30 = vector.load %arg3[%c0_7, %c0_8] : memref<4x1xf32, #tpu.memory_space<vmem>>, vector<4x1xf32>
    %31 = vector.broadcast %30 : vector<4x1xf32> to vector<4x256xf32>
    %32 = arith.addf %1, %31 : vector<4x256xf32>
    %c0_9 = arith.constant 0 : index
    %c94 = arith.constant 94 : index
    %33 = vector.load %arg7[%c0_9, %c94] : memref<4x418xf32, #tpu.memory_space<vmem>>, vector<4x256xf32>
    %cst_10 = arith.constant 0.000000e+00 : f32
    %34 = vector.broadcast %cst_10 : f32 to vector<4x256xf32>
    %35 = arith.select %14, %33, %34 : vector<4x256xi1>, vector<4x256xf32>
    %c0_11 = arith.constant 0 : index
    %c0_12 = arith.constant 0 : index
    %36 = vector.load %arg2[%c0_11, %c0_12] : memref<4x25xf32, #tpu.memory_space<vmem>>, vector<4x1xf32>
    %37 = vector.broadcast %36 : vector<4x1xf32> to vector<4x256xf32>
    %38 = arith.mulf %35, %37 : vector<4x256xf32>
    %39 = arith.addf %32, %38 : vector<4x256xf32>
    %c0_13 = arith.constant 0 : index
    %c95 = arith.constant 95 : index
    %40 = vector.load %arg7[%c0_13, %c95] : memref<4x418xf32, #tpu.memory_space<vmem>>, vector<4x256xf32>
    %cst_14 = arith.constant 0.000000e+00 : f32
    %41 = vector.broadcast %cst_14 : f32 to vector<4x256xf32>
    %42 = arith.select %19, %40, %41 : vector<4x256xi1>, vector<4x256xf32>
    %c0_15 = arith.constant 0 : index
    %c1 = arith.constant 1 : index
    %43 = vector.load %arg2[%c0_15, %c1] : memref<4x25xf32, #tpu.memory_space<vmem>>, vector<4x1xf32>
    %44 = vector.broadcast %43 : vector<4x1xf32> to vector<4x256xf32>
    %45 = arith.mulf %42, %44 : vector<4x256xf32>
    %46 = arith.addf %39, %45 : vector<4x256xf32>
    %c0_16 = arith.constant 0 : index
    %c96 = arith.constant 96 : index
    %47 = vector.load %arg7[%c0_16, %c96] : memref<4x418xf32, #tpu.memory_space<vmem>>, vector<4x256xf32>
    %c0_17 = arith.constant 0 : index
    %c2 = arith.constant 2 : index
    %48 = vector.load %arg2[%c0_17, %c2] : memref<4x25xf32, #tpu.memory_space<vmem>>, vector<4x1xf32>
    %49 = vector.broadcast %48 : vector<4x1xf32> to vector<4x256xf32>
    %50 = arith.mulf %47, %49 : vector<4x256xf32>
    %51 = arith.addf %46, %50 : vector<4x256xf32>
    %c0_18 = arith.constant 0 : index
    %c97 = arith.constant 97 : index
    %52 = vector.load %arg7[%c0_18, %c97] : memref<4x418xf32, #tpu.memory_space<vmem>>, vector<4x256xf32>
    %cst_19 = arith.constant 0.000000e+00 : f32
    %53 = vector.broadcast %cst_19 : f32 to vector<4x256xf32>
    %54 = arith.select %24, %52, %53 : vector<4x256xi1>, vector<4x256xf32>
    %c0_20 = arith.constant 0 : index
    %c3 = arith.constant 3 : index
    %55 = vector.load %arg2[%c0_20, %c3] : memref<4x25xf32, #tpu.memory_space<vmem>>, vector<4x1xf32>
    %56 = vector.broadcast %55 : vector<4x1xf32> to vector<4x256xf32>
    %57 = arith.mulf %54, %56 : vector<4x256xf32>
    %58 = arith.addf %51, %57 : vector<4x256xf32>
    %c0_21 = arith.constant 0 : index
    %c98 = arith.constant 98 : index
    %59 = vector.load %arg7[%c0_21, %c98] : memref<4x418xf32, #tpu.memory_space<vmem>>, vector<4x256xf32>
    %cst_22 = arith.constant 0.000000e+00 : f32
    %60 = vector.broadcast %cst_22 : f32 to vector<4x256xf32>
    %61 = arith.select %29, %59, %60 : vector<4x256xi1>, vector<4x256xf32>
    %c0_23 = arith.constant 0 : index
    %c4 = arith.constant 4 : index
    %62 = vector.load %arg2[%c0_23, %c4] : memref<4x25xf32, #tpu.memory_space<vmem>>, vector<4x1xf32>
    %63 = vector.broadcast %62 : vector<4x1xf32> to vector<4x256xf32>
    %64 = arith.mulf %61, %63 : vector<4x256xf32>
    %65 = arith.addf %58, %64 : vector<4x256xf32>
    %c0_24 = arith.constant 0 : index
    %c110 = arith.constant 110 : index
    %66 = vector.load %arg7[%c0_24, %c110] : memref<4x418xf32, #tpu.memory_space<vmem>>, vector<4x256xf32>
    %cst_25 = arith.constant 0.000000e+00 : f32
    %67 = vector.broadcast %cst_25 : f32 to vector<4x256xf32>
    %68 = arith.select %14, %66, %67 : vector<4x256xi1>, vector<4x256xf32>
    %c0_26 = arith.constant 0 : index
    %c5 = arith.constant 5 : index
    %69 = vector.load %arg2[%c0_26, %c5] : memref<4x25xf32, #tpu.memory_space<vmem>>, vector<4x1xf32>
    %70 = vector.broadcast %69 : vector<4x1xf32> to vector<4x256xf32>
    %71 = arith.mulf %68, %70 : vector<4x256xf32>
    %72 = arith.addf %65, %71 : vector<4x256xf32>
    %c0_27 = arith.constant 0 : index
    %c111 = arith.constant 111 : index
    %73 = vector.load %arg7[%c0_27, %c111] : memref<4x418xf32, #tpu.memory_space<vmem>>, vector<4x256xf32>
    %cst_28 = arith.constant 0.000000e+00 : f32
    %74 = vector.broadcast %cst_28 : f32 to vector<4x256xf32>
    %75 = arith.select %19, %73, %74 : vector<4x256xi1>, vector<4x256xf32>
    %c0_29 = arith.constant 0 : index
    %c6 = arith.constant 6 : index
    %76 = vector.load %arg2[%c0_29, %c6] : memref<4x25xf32, #tpu.memory_space<vmem>>, vector<4x1xf32>
    %77 = vector.broadcast %76 : vector<4x1xf32> to vector<4x256xf32>
    %78 = arith.mulf %75, %77 : vector<4x256xf32>
    %79 = arith.addf %72, %78 : vector<4x256xf32>
    %c0_30 = arith.constant 0 : index
    %c112 = arith.constant 112 : index
    %80 = vector.load %arg7[%c0_30, %c112] : memref<4x418xf32, #tpu.memory_space<vmem>>, vector<4x256xf32>
    %c0_31 = arith.constant 0 : index
    %c7 = arith.constant 7 : index
    %81 = vector.load %arg2[%c0_31, %c7] : memref<4x25xf32, #tpu.memory_space<vmem>>, vector<4x1xf32>
    %82 = vector.broadcast %81 : vector<4x1xf32> to vector<4x256xf32>
    %83 = arith.mulf %80, %82 : vector<4x256xf32>
    %84 = arith.addf %79, %83 : vector<4x256xf32>
    %c0_32 = arith.constant 0 : index
    %c113 = arith.constant 113 : index
    %85 = vector.load %arg7[%c0_32, %c113] : memref<4x418xf32, #tpu.memory_space<vmem>>, vector<4x256xf32>
    %cst_33 = arith.constant 0.000000e+00 : f32
    %86 = vector.broadcast %cst_33 : f32 to vector<4x256xf32>
    %87 = arith.select %24, %85, %86 : vector<4x256xi1>, vector<4x256xf32>
    %c0_34 = arith.constant 0 : index
    %c8 = arith.constant 8 : index
    %88 = vector.load %arg2[%c0_34, %c8] : memref<4x25xf32, #tpu.memory_space<vmem>>, vector<4x1xf32>
    %89 = vector.broadcast %88 : vector<4x1xf32> to vector<4x256xf32>
    %90 = arith.mulf %87, %89 : vector<4x256xf32>
    %91 = arith.addf %84, %90 : vector<4x256xf32>
    %c0_35 = arith.constant 0 : index
    %c114 = arith.constant 114 : index
    %92 = vector.load %arg7[%c0_35, %c114] : memref<4x418xf32, #tpu.memory_space<vmem>>, vector<4x256xf32>
    %cst_36 = arith.constant 0.000000e+00 : f32
    %93 = vector.broadcast %cst_36 : f32 to vector<4x256xf32>
    %94 = arith.select %29, %92, %93 : vector<4x256xi1>, vector<4x256xf32>
    %c0_37 = arith.constant 0 : index
    %c9 = arith.constant 9 : index
    %95 = vector.load %arg2[%c0_37, %c9] : memref<4x25xf32, #tpu.memory_space<vmem>>, vector<4x1xf32>
    %96 = vector.broadcast %95 : vector<4x1xf32> to vector<4x256xf32>
    %97 = arith.mulf %94, %96 : vector<4x256xf32>
    %98 = arith.addf %91, %97 : vector<4x256xf32>
    %c0_38 = arith.constant 0 : index
    %c126 = arith.constant 126 : index
    %99 = vector.load %arg7[%c0_38, %c126] : memref<4x418xf32, #tpu.memory_space<vmem>>, vector<4x256xf32>
    %cst_39 = arith.constant 0.000000e+00 : f32
    %100 = vector.broadcast %cst_39 : f32 to vector<4x256xf32>
    %101 = arith.select %14, %99, %100 : vector<4x256xi1>, vector<4x256xf32>
    %c0_40 = arith.constant 0 : index
    %c10 = arith.constant 10 : index
    %102 = vector.load %arg2[%c0_40, %c10] : memref<4x25xf32, #tpu.memory_space<vmem>>, vector<4x1xf32>
    %103 = vector.broadcast %102 : vector<4x1xf32> to vector<4x256xf32>
    %104 = arith.mulf %101, %103 : vector<4x256xf32>
    %105 = arith.addf %98, %104 : vector<4x256xf32>
    %c0_41 = arith.constant 0 : index
    %c127 = arith.constant 127 : index
    %106 = vector.load %arg7[%c0_41, %c127] : memref<4x418xf32, #tpu.memory_space<vmem>>, vector<4x256xf32>
    %cst_42 = arith.constant 0.000000e+00 : f32
    %107 = vector.broadcast %cst_42 : f32 to vector<4x256xf32>
    %108 = arith.select %19, %106, %107 : vector<4x256xi1>, vector<4x256xf32>
    %c0_43 = arith.constant 0 : index
    %c11 = arith.constant 11 : index
    %109 = vector.load %arg2[%c0_43, %c11] : memref<4x25xf32, #tpu.memory_space<vmem>>, vector<4x1xf32>
    %110 = vector.broadcast %109 : vector<4x1xf32> to vector<4x256xf32>
    %111 = arith.mulf %108, %110 : vector<4x256xf32>
    %112 = arith.addf %105, %111 : vector<4x256xf32>
    %c0_44 = arith.constant 0 : index
    %c128_45 = arith.constant 128 : index
    %113 = vector.load %arg7[%c0_44, %c128_45] : memref<4x418xf32, #tpu.memory_space<vmem>>, vector<4x256xf32>
    %c0_46 = arith.constant 0 : index
    %c12 = arith.constant 12 : index
    %114 = vector.load %arg2[%c0_46, %c12] : memref<4x25xf32, #tpu.memory_space<vmem>>, vector<4x1xf32>
    %115 = vector.broadcast %114 : vector<4x1xf32> to vector<4x256xf32>
    %116 = arith.mulf %113, %115 : vector<4x256xf32>
    %117 = arith.addf %112, %116 : vector<4x256xf32>
    %c0_47 = arith.constant 0 : index
    %c129 = arith.constant 129 : index
    %118 = vector.load %arg7[%c0_47, %c129] : memref<4x418xf32, #tpu.memory_space<vmem>>, vector<4x256xf32>
    %cst_48 = arith.constant 0.000000e+00 : f32
    %119 = vector.broadcast %cst_48 : f32 to vector<4x256xf32>
    %120 = arith.select %24, %118, %119 : vector<4x256xi1>, vector<4x256xf32>
    %c0_49 = arith.constant 0 : index
    %c13 = arith.constant 13 : index
    %121 = vector.load %arg2[%c0_49, %c13] : memref<4x25xf32, #tpu.memory_space<vmem>>, vector<4x1xf32>
    %122 = vector.broadcast %121 : vector<4x1xf32> to vector<4x256xf32>
    %123 = arith.mulf %120, %122 : vector<4x256xf32>
    %124 = arith.addf %117, %123 : vector<4x256xf32>
    %c0_50 = arith.constant 0 : index
    %c130 = arith.constant 130 : index
    %125 = vector.load %arg7[%c0_50, %c130] : memref<4x418xf32, #tpu.memory_space<vmem>>, vector<4x256xf32>
    %cst_51 = arith.constant 0.000000e+00 : f32
    %126 = vector.broadcast %cst_51 : f32 to vector<4x256xf32>
    %127 = arith.select %29, %125, %126 : vector<4x256xi1>, vector<4x256xf32>
    %c0_52 = arith.constant 0 : index
    %c14 = arith.constant 14 : index
    %128 = vector.load %arg2[%c0_52, %c14] : memref<4x25xf32, #tpu.memory_space<vmem>>, vector<4x1xf32>
    %129 = vector.broadcast %128 : vector<4x1xf32> to vector<4x256xf32>
    %130 = arith.mulf %127, %129 : vector<4x256xf32>
    %131 = arith.addf %124, %130 : vector<4x256xf32>
    %c0_53 = arith.constant 0 : index
    %c142 = arith.constant 142 : index
    %132 = vector.load %arg7[%c0_53, %c142] : memref<4x418xf32, #tpu.memory_space<vmem>>, vector<4x256xf32>
    %cst_54 = arith.constant 0.000000e+00 : f32
    %133 = vector.broadcast %cst_54 : f32 to vector<4x256xf32>
    %134 = arith.select %14, %132, %133 : vector<4x256xi1>, vector<4x256xf32>
    %c0_55 = arith.constant 0 : index
    %c15 = arith.constant 15 : index
    %135 = vector.load %arg2[%c0_55, %c15] : memref<4x25xf32, #tpu.memory_space<vmem>>, vector<4x1xf32>
    %136 = vector.broadcast %135 : vector<4x1xf32> to vector<4x256xf32>
    %137 = arith.mulf %134, %136 : vector<4x256xf32>
    %138 = arith.addf %131, %137 : vector<4x256xf32>
    %c0_56 = arith.constant 0 : index
    %c143 = arith.constant 143 : index
    %139 = vector.load %arg7[%c0_56, %c143] : memref<4x418xf32, #tpu.memory_space<vmem>>, vector<4x256xf32>
    %cst_57 = arith.constant 0.000000e+00 : f32
    %140 = vector.broadcast %cst_57 : f32 to vector<4x256xf32>
    %141 = arith.select %19, %139, %140 : vector<4x256xi1>, vector<4x256xf32>
    %c0_58 = arith.constant 0 : index
    %c16 = arith.constant 16 : index
    %142 = vector.load %arg2[%c0_58, %c16] : memref<4x25xf32, #tpu.memory_space<vmem>>, vector<4x1xf32>
    %143 = vector.broadcast %142 : vector<4x1xf32> to vector<4x256xf32>
    %144 = arith.mulf %141, %143 : vector<4x256xf32>
    %145 = arith.addf %138, %144 : vector<4x256xf32>
    %c0_59 = arith.constant 0 : index
    %c144 = arith.constant 144 : index
    %146 = vector.load %arg7[%c0_59, %c144] : memref<4x418xf32, #tpu.memory_space<vmem>>, vector<4x256xf32>
    %c0_60 = arith.constant 0 : index
    %c17 = arith.constant 17 : index
    %147 = vector.load %arg2[%c0_60, %c17] : memref<4x25xf32, #tpu.memory_space<vmem>>, vector<4x1xf32>
    %148 = vector.broadcast %147 : vector<4x1xf32> to vector<4x256xf32>
    %149 = arith.mulf %146, %148 : vector<4x256xf32>
    %150 = arith.addf %145, %149 : vector<4x256xf32>
    %c0_61 = arith.constant 0 : index
    %c145 = arith.constant 145 : index
    %151 = vector.load %arg7[%c0_61, %c145] : memref<4x418xf32, #tpu.memory_space<vmem>>, vector<4x256xf32>
    %cst_62 = arith.constant 0.000000e+00 : f32
    %152 = vector.broadcast %cst_62 : f32 to vector<4x256xf32>
    %153 = arith.select %24, %151, %152 : vector<4x256xi1>, vector<4x256xf32>
    %c0_63 = arith.constant 0 : index
    %c18 = arith.constant 18 : index
    %154 = vector.load %arg2[%c0_63, %c18] : memref<4x25xf32, #tpu.memory_space<vmem>>, vector<4x1xf32>
    %155 = vector.broadcast %154 : vector<4x1xf32> to vector<4x256xf32>
    %156 = arith.mulf %153, %155 : vector<4x256xf32>
    %157 = arith.addf %150, %156 : vector<4x256xf32>
    %c0_64 = arith.constant 0 : index
    %c146 = arith.constant 146 : index
    %158 = vector.load %arg7[%c0_64, %c146] : memref<4x418xf32, #tpu.memory_space<vmem>>, vector<4x256xf32>
    %cst_65 = arith.constant 0.000000e+00 : f32
    %159 = vector.broadcast %cst_65 : f32 to vector<4x256xf32>
    %160 = arith.select %29, %158, %159 : vector<4x256xi1>, vector<4x256xf32>
    %c0_66 = arith.constant 0 : index
    %c19 = arith.constant 19 : index
    %161 = vector.load %arg2[%c0_66, %c19] : memref<4x25xf32, #tpu.memory_space<vmem>>, vector<4x1xf32>
    %162 = vector.broadcast %161 : vector<4x1xf32> to vector<4x256xf32>
    %163 = arith.mulf %160, %162 : vector<4x256xf32>
    %164 = arith.addf %157, %163 : vector<4x256xf32>
    %c0_67 = arith.constant 0 : index
    %c158 = arith.constant 158 : index
    %165 = vector.load %arg7[%c0_67, %c158] : memref<4x418xf32, #tpu.memory_space<vmem>>, vector<4x256xf32>
    %cst_68 = arith.constant 0.000000e+00 : f32
    %166 = vector.broadcast %cst_68 : f32 to vector<4x256xf32>
    %167 = arith.select %14, %165, %166 : vector<4x256xi1>, vector<4x256xf32>
    %c0_69 = arith.constant 0 : index
    %c20 = arith.constant 20 : index
    %168 = vector.load %arg2[%c0_69, %c20] : memref<4x25xf32, #tpu.memory_space<vmem>>, vector<4x1xf32>
    %169 = vector.broadcast %168 : vector<4x1xf32> to vector<4x256xf32>
    %170 = arith.mulf %167, %169 : vector<4x256xf32>
    %171 = arith.addf %164, %170 : vector<4x256xf32>
    %c0_70 = arith.constant 0 : index
    %c159 = arith.constant 159 : index
    %172 = vector.load %arg7[%c0_70, %c159] : memref<4x418xf32, #tpu.memory_space<vmem>>, vector<4x256xf32>
    %cst_71 = arith.constant 0.000000e+00 : f32
    %173 = vector.broadcast %cst_71 : f32 to vector<4x256xf32>
    %174 = arith.select %19, %172, %173 : vector<4x256xi1>, vector<4x256xf32>
    %c0_72 = arith.constant 0 : index
    %c21 = arith.constant 21 : index
    %175 = vector.load %arg2[%c0_72, %c21] : memref<4x25xf32, #tpu.memory_space<vmem>>, vector<4x1xf32>
    %176 = vector.broadcast %175 : vector<4x1xf32> to vector<4x256xf32>
    %177 = arith.mulf %174, %176 : vector<4x256xf32>
    %178 = arith.addf %171, %177 : vector<4x256xf32>
    %c0_73 = arith.constant 0 : index
    %c160 = arith.constant 160 : index
    %179 = vector.load %arg7[%c0_73, %c160] : memref<4x418xf32, #tpu.memory_space<vmem>>, vector<4x256xf32>
    %c0_74 = arith.constant 0 : index
    %c22 = arith.constant 22 : index
    %180 = vector.load %arg2[%c0_74, %c22] : memref<4x25xf32, #tpu.memory_space<vmem>>, vector<4x1xf32>
    %181 = vector.broadcast %180 : vector<4x1xf32> to vector<4x256xf32>
    %182 = arith.mulf %179, %181 : vector<4x256xf32>
    %183 = arith.addf %178, %182 : vector<4x256xf32>
    %c0_75 = arith.constant 0 : index
    %c161 = arith.constant 161 : index
    %184 = vector.load %arg7[%c0_75, %c161] : memref<4x418xf32, #tpu.memory_space<vmem>>, vector<4x256xf32>
    %cst_76 = arith.constant 0.000000e+00 : f32
    %185 = vector.broadcast %cst_76 : f32 to vector<4x256xf32>
    %186 = arith.select %24, %184, %185 : vector<4x256xi1>, vector<4x256xf32>
    %c0_77 = arith.constant 0 : index
    %c23 = arith.constant 23 : index
    %187 = vector.load %arg2[%c0_77, %c23] : memref<4x25xf32, #tpu.memory_space<vmem>>, vector<4x1xf32>
    %188 = vector.broadcast %187 : vector<4x1xf32> to vector<4x256xf32>
    %189 = arith.mulf %186, %188 : vector<4x256xf32>
    %190 = arith.addf %183, %189 : vector<4x256xf32>
    %c0_78 = arith.constant 0 : index
    %c162 = arith.constant 162 : index
    %191 = vector.load %arg7[%c0_78, %c162] : memref<4x418xf32, #tpu.memory_space<vmem>>, vector<4x256xf32>
    %cst_79 = arith.constant 0.000000e+00 : f32
    %192 = vector.broadcast %cst_79 : f32 to vector<4x256xf32>
    %193 = arith.select %29, %191, %192 : vector<4x256xi1>, vector<4x256xf32>
    %c0_80 = arith.constant 0 : index
    %c24 = arith.constant 24 : index
    %194 = vector.load %arg2[%c0_80, %c24] : memref<4x25xf32, #tpu.memory_space<vmem>>, vector<4x1xf32>
    %195 = vector.broadcast %194 : vector<4x1xf32> to vector<4x256xf32>
    %196 = arith.mulf %193, %195 : vector<4x256xf32>
    %197 = arith.addf %190, %196 : vector<4x256xf32>
    %cst_81 = arith.constant 0.000000e+00 : f32
    %198 = vector.broadcast %cst_81 : f32 to vector<8x256xf32>
    %c0_82 = arith.constant 0 : index
    %c0_83 = arith.constant 0 : index
    %199 = vector.load %arg5[%c0_82, %c0_83] : memref<8x1xf32, #tpu.memory_space<vmem>>, vector<8x1xf32>
    %200 = vector.broadcast %199 : vector<8x1xf32> to vector<8x256xf32>
    %201 = arith.addf %198, %200 : vector<8x256xf32>
    %c0_84 = arith.constant 0 : index
    %c0_85 = arith.constant 0 : index
    %202 = vector.load %arg4[%c0_84, %c0_85] : memref<8x4xf32, #tpu.memory_space<vmem>>, vector<8x1xf32>
    %203 = vector.extract_strided_slice %197 {offsets = [0, 0], sizes = [1, 256], strides = [1, 1]} : vector<4x256xf32> to vector<1x256xf32>
    %204 = vector.broadcast %202 : vector<8x1xf32> to vector<8x256xf32>
    %205 = vector.broadcast %203 : vector<1x256xf32> to vector<8x256xf32>
    %206 = arith.mulf %204, %205 : vector<8x256xf32>
    %207 = arith.addf %201, %206 : vector<8x256xf32>
    %c0_86 = arith.constant 0 : index
    %c1_87 = arith.constant 1 : index
    %208 = vector.load %arg4[%c0_86, %c1_87] : memref<8x4xf32, #tpu.memory_space<vmem>>, vector<8x1xf32>
    %209 = vector.extract_strided_slice %197 {offsets = [1, 0], sizes = [1, 256], strides = [1, 1]} : vector<4x256xf32> to vector<1x256xf32>
    %210 = vector.broadcast %208 : vector<8x1xf32> to vector<8x256xf32>
    %211 = vector.broadcast %209 : vector<1x256xf32> to vector<8x256xf32>
    %212 = arith.mulf %210, %211 : vector<8x256xf32>
    %213 = arith.addf %207, %212 : vector<8x256xf32>
    %c0_88 = arith.constant 0 : index
    %c2_89 = arith.constant 2 : index
    %214 = vector.load %arg4[%c0_88, %c2_89] : memref<8x4xf32, #tpu.memory_space<vmem>>, vector<8x1xf32>
    %215 = vector.extract_strided_slice %197 {offsets = [2, 0], sizes = [1, 256], strides = [1, 1]} : vector<4x256xf32> to vector<1x256xf32>
    %216 = vector.broadcast %214 : vector<8x1xf32> to vector<8x256xf32>
    %217 = vector.broadcast %215 : vector<1x256xf32> to vector<8x256xf32>
    %218 = arith.mulf %216, %217 : vector<8x256xf32>
    %219 = arith.addf %213, %218 : vector<8x256xf32>
    %c0_90 = arith.constant 0 : index
    %c3_91 = arith.constant 3 : index
    %220 = vector.load %arg4[%c0_90, %c3_91] : memref<8x4xf32, #tpu.memory_space<vmem>>, vector<8x1xf32>
    %221 = vector.extract_strided_slice %197 {offsets = [3, 0], sizes = [1, 256], strides = [1, 1]} : vector<4x256xf32> to vector<1x256xf32>
    %222 = vector.broadcast %220 : vector<8x1xf32> to vector<8x256xf32>
    %223 = vector.broadcast %221 : vector<1x256xf32> to vector<8x256xf32>
    %224 = arith.mulf %222, %223 : vector<8x256xf32>
    %225 = arith.addf %219, %224 : vector<8x256xf32>
    %c0_92 = arith.constant 0 : index
    %c0_93 = arith.constant 0 : index
    %c0_94 = arith.constant 0 : index
    %226 = vector.load %arg6[%c0_92, %c0_93, %c0_94] : memref<1x8x256xf32, #tpu.memory_space<vmem>>, vector<1x8x256xf32>
    %227 = vector.shape_cast %226 : vector<1x8x256xf32> to vector<8x256xf32>
    %228 = vector.shape_cast %225 : vector<8x256xf32> to vector<1x8x256xf32>
    tpu.vector_store %arg6[%c0_92, %c0_93, %c0_94], %228 {strides = array<i32>} : memref<1x8x256xf32, #tpu.memory_space<vmem>>, vector<1x8x256xf32>,
    return
  }
  func.func @transform_0(%arg0: i32) -> (i32, i32, i32) {
    %c0_i32 = arith.constant 0 : i32
    %c0_i32_0 = arith.constant 0 : i32
    %c0_i32_1 = arith.constant 0 : i32
    return %arg0, %c0_i32, %c0_i32_0 : i32, i32, i32
  }
  func.func @transform_1(%arg0: i32) -> (i32, i32) {
    %c0_i32 = arith.constant 0 : i32
    %c0_i32_0 = arith.constant 0 : i32
    %c0_i32_1 = arith.constant 0 : i32
    return %c0_i32, %c0_i32_0 : i32, i32
  }
  func.func @transform_2(%arg0: i32) -> (i32, i32) {
    %c0_i32 = arith.constant 0 : i32
    %c0_i32_0 = arith.constant 0 : i32
    %c0_i32_1 = arith.constant 0 : i32
    return %c0_i32, %c0_i32_0 : i32, i32
  }
  func.func @transform_3(%arg0: i32) -> (i32, i32) {
    %c0_i32 = arith.constant 0 : i32
    %c0_i32_0 = arith.constant 0 : i32
    %c0_i32_1 = arith.constant 0 : i32
    return %c0_i32, %c0_i32_0 : i32, i32
  }
  func.func @transform_4(%arg0: i32) -> (i32, i32) {
    %c0_i32 = arith.constant 0 : i32
    %c0_i32_0 = arith.constant 0 : i32
    %c0_i32_1 = arith.constant 0 : i32
    return %c0_i32, %c0_i32_0 : i32, i32
  }
  func.func @transform_5(%arg0: i32) -> (i32, i32, i32) {
    %c0_i32 = arith.constant 0 : i32
    %c0_i32_0 = arith.constant 0 : i32
    %c0_i32_1 = arith.constant 0 : i32
    return %arg0, %c0_i32, %c0_i32_0 : i32, i32, i32
  }
}

</mosaic_0001>

<llo_original>
// kernel: res_conv_block_forward.1
$region0: #{res_conv_block_forward.1}
  #allocation0 [shape = 'u32[]', space=smem, size = 0x4, offset = 0x4, fixed_abs, tag = 'smem constant byte address 0x4 - core index']
  #allocation1 [shape = 'u32[144,128]{1,0:T(1,128)}', space=vmem, size = 0x12000, scoped, tag = 'internal scratch']
  #allocation2 [shape = 'f32[4,418]{1,0:T(4,128)}', space=vmem, size = 0x2000, scoped, tag = 'scratch operand']
  %s0 = inlined_call_operand.vmem [shape: f32[2,4,256], index: 0, kind: input, shape index: {}]
  %s1 = inlined_call_operand.vmem [shape: f32[4,25], index: 1, kind: input, shape index: {}]
  %s2 = inlined_call_operand.vmem [shape: f32[4,1], index: 2, kind: input, shape index: {}]
  %s3 = inlined_call_operand.vmem [shape: f32[8,4], index: 3, kind: input, shape index: {}]
  %s4 = inlined_call_operand.vmem [shape: f32[8,1], index: 4, kind: input, shape index: {}]
  %s5 = inlined_call_operand.vmem [shape: f32[2,8,256], index: 5, kind: output, shape index: {}]
  %s6 = sld [smem:[#allocation0]]
  $region53: #{res_conv_block_forward.1} parent=0
    _
  %s8 = ssub.s32 1, %s6
  %s9 = scalar_select 0, %s8, %s6
  loop: start=0, step=1, limit=4
  $region2: #{res_conv_block_forward.1} parent=0 // loop_pre_header
    _
  $region3: #{res_conv_block_forward.1} parent=0 // loop_header
    %s11 = sphi 0, %s15
    %p12 = scmp.ge.s32.totalorder %s11, 4
    %s21 = sphi 0, %s23
    %s24 = sphi 0, %s21
    %s25 = sphi 0, %s24
    %s41 = sphi 0, %s25
    %s45 = sphi 0, %s45
    %s47 = sphi 0, %s45
    %s48 = sphi 0, %s47
    %s62 = sphi 0, %s48
    %s66 = sphi 0, %s66
    %s68 = sphi 0, %s66
    %s69 = sphi 0, %s68
    %s83 = sphi 0, %s69
    %s87 = sphi 0, %s87
    %s89 = sphi 0, %s87
    %s90 = sphi 0, %s89
    %s104 = sphi 0, %s90
    %s108 = sphi 0, %s108
    %s110 = sphi 0, %s108
    %s111 = sphi 0, %s110
    %s125 = sphi 0, %s111
    %s131 = sphi 0, %s133
    %s134 = sphi 0, %s131
    %s135 = sphi 0, %s134
    %s151 = sphi 0, %s135
  $region4: #{res_conv_block_forward.1} parent=0 // loop_header_branch
    %14 = sbr.rel (%p12) target = $region8
  $region5: #{res_conv_block_forward.1} parent=0 // loop_body
    %s16 = ssub.s32 %s11, 1
    %s17 = ssub.s32 %s11, 2
    %s18 = sadd.s32 %s11, 1
    %s19 = ssub.s32 %s11, %s18
    %p20 = scmp.eq.s32.totalorder %s19, 0
    %s22 = sadd.s32 %s21, 1
    %s23 = scalar_select %p20, %s21, %s22
    %p26 = pneg %p20
    %p27 = scmp.eq.s32.totalorder %s11, 1
    %p28 = por %p26, %p27
    %p29 = scmp.ne.s32.totalorder %s21, %s24
    %p30 = scmp.eq.s32.totalorder %s11, 0
    %p31 = por %p29, %p30
    %p32 = scmp.ne.s32.totalorder %s21, %s24
    %p33 = scmp.eq.s32.totalorder %s16, 1
    %p34 = por %p32, %p33
    %p35 = scmp.ne.s32.totalorder %s24, %s25
    %p36 = scmp.eq.s32.totalorder %s16, 0
    %p37 = por %p35, %p36
    %p38 = scmp.ne.s32.totalorder %s24, %s25
    %p39 = scmp.eq.s32.totalorder %s17, 1
    %p40 = por %p38, %p39
    %p42 = scmp.ne.s32.totalorder %s25, %s41
    %p43 = scmp.eq.s32.totalorder %s17, 0
    %p44 = por %p42, %p43
    %s46 = sadd.s32 %s45, 1
    %p49 = scmp.eq.s32.totalorder %s11, 1
    %p50 = scmp.ne.s32.totalorder %s45, %s47
    %p51 = scmp.eq.s32.totalorder %s11, 0
    %p52 = por %p50, %p51
    %p53 = scmp.ne.s32.totalorder %s45, %s47
    %p54 = scmp.eq.s32.totalorder %s16, 1
    %p55 = por %p53, %p54
    %p56 = scmp.ne.s32.totalorder %s47, %s48
    %p57 = scmp.eq.s32.totalorder %s16, 0
    %p58 = por %p56, %p57
    %p59 = scmp.ne.s32.totalorder %s47, %s48
    %p60 = scmp.eq.s32.totalorder %s17, 1
    %p61 = por %p59, %p60
    %p63 = scmp.ne.s32.totalorder %s48, %s62
    %p64 = scmp.eq.s32.totalorder %s17, 0
    %p65 = por %p63, %p64
    %s67 = sadd.s32 %s66, 1
    %p70 = scmp.eq.s32.totalorder %s11, 1
    %p71 = scmp.ne.s32.totalorder %s66, %s68
    %p72 = scmp.eq.s32.totalorder %s11, 0
    %p73 = por %p71, %p72
    %p74 = scmp.ne.s32.totalorder %s66, %s68
    %p75 = scmp.eq.s32.totalorder %s16, 1
    %p76 = por %p74, %p75
    %p77 = scmp.ne.s32.totalorder %s68, %s69
    %p78 = scmp.eq.s32.totalorder %s16, 0
    %p79 = por %p77, %p78
    %p80 = scmp.ne.s32.totalorder %s68, %s69
    %p81 = scmp.eq.s32.totalorder %s17, 1
    %p82 = por %p80, %p81
    %p84 = scmp.ne.s32.totalorder %s69, %s83
    %p85 = scmp.eq.s32.totalorder %s17, 0
    %p86 = por %p84, %p85
    %s88 = sadd.s32 %s87, 1
    %p91 = scmp.eq.s32.totalorder %s11, 1
    %p92 = scmp.ne.s32.totalorder %s87, %s89
    %p93 = scmp.eq.s32.totalorder %s11, 0
    %p94 = por %p92, %p93
    %p95 = scmp.ne.s32.totalorder %s87, %s89
    %p96 = scmp.eq.s32.totalorder %s16, 1
    %p97 = por %p95, %p96
    %p98 = scmp.ne.s32.totalorder %s89, %s90
    %p99 = scmp.eq.s32.totalorder %s16, 0
    %p100 = por %p98, %p99
    %p101 = scmp.ne.s32.totalorder %s89, %s90
    %p102 = scmp.eq.s32.totalorder %s17, 1
    %p103 = por %p101, %p102
    %p105 = scmp.ne.s32.totalorder %s90, %s104
    %p106 = scmp.eq.s32.totalorder %s17, 0
    %p107 = por %p105, %p106
    %s109 = sadd.s32 %s108, 1
    %p112 = scmp.eq.s32.totalorder %s11, 1
    %p113 = scmp.ne.s32.totalorder %s108, %s110
    %p114 = scmp.eq.s32.totalorder %s11, 0
    %p115 = por %p113, %p114
    %p116 = scmp.ne.s32.totalorder %s108, %s110
    %p117 = scmp.eq.s32.totalorder %s16, 1
    %p118 = por %p116, %p117
    %p119 = scmp.ne.s32.totalorder %s110, %s111
    %p120 = scmp.eq.s32.totalorder %s16, 0
    %p121 = por %p119, %p120
    %p122 = scmp.ne.s32.totalorder %s110, %s111
    %p123 = scmp.eq.s32.totalorder %s17, 1
    %p124 = por %p122, %p123
    %p126 = scmp.ne.s32.totalorder %s111, %s125
    %p127 = scmp.eq.s32.totalorder %s17, 0
    %p128 = por %p126, %p127
    %s129 = ssub.s32 %s11, %s18
    %p130 = scmp.eq.s32.totalorder %s129, 0
    %s132 = sadd.s32 %s131, 1
    %s133 = scalar_select %p130, %s131, %s132
    %p136 = pneg %p130
    %p137 = scmp.eq.s32.totalorder %s11, 1
    %p138 = por %p136, %p137
    %p139 = scmp.ne.s32.totalorder %s131, %s134
    %p140 = scmp.eq.s32.totalorder %s11, 0
    %p141 = por %p139, %p140
    %p142 = scmp.ne.s32.totalorder %s131, %s134
    %p143 = scmp.eq.s32.totalorder %s16, 1
    %p144 = por %p142, %p143
    %p145 = scmp.ne.s32.totalorder %s134, %s135
    %p146 = scmp.eq.s32.totalorder %s16, 0
    %p147 = por %p145, %p146
    %p148 = scmp.ne.s32.totalorder %s134, %s135
    %p149 = scmp.eq.s32.totalorder %s17, 1
    %p150 = por %p148, %p149
    %p152 = scmp.ne.s32.totalorder %s135, %s151
    %p153 = scmp.eq.s32.totalorder %s17, 0
    %p154 = por %p152, %p153
    %p155 = scmp.le.s32.totalorder 1, %s11
    %p156 = scmp.lt.s32.totalorder %s11, 3
    %p157 = pnand %p155, %p156
    %p158 = pneg %p157
    // Predicated region
    $region9: #{res_conv_block_forward.1} parent=5 // pred_check
      _
    $region10: #{res_conv_block_forward.1} parent=5 // pred_check_branch
      %160 = sbr.rel (%p157) target = $region12
    $region11: #{res_conv_block_forward.1} parent=5 // pred_region
      %s161 = ssub.s32 %s11, 1
      // Predicated region
      $region13: #{res_conv_block_forward.1} parent=11 // pred_check
        %p162 = pneg %p58
      $region14: #{res_conv_block_forward.1} parent=11 // pred_check_branch
        %164 = sbr.rel (%p162) target = $region16
      $region15: #{res_conv_block_forward.1} parent=11 // pred_region
        _
      $region16: #{res_conv_block_forward.1} parent=11 // pred_fallthru
        _
      // Predicated region
      $region17: #{res_conv_block_forward.1} parent=11 // pred_check
        %p165 = pneg %p79
      $region18: #{res_conv_block_forward.1} parent=11 // pred_check_branch
        %167 = sbr.rel (%p165) target = $region20
      $region19: #{res_conv_block_forward.1} parent=11 // pred_region
        _
      $region20: #{res_conv_block_forward.1} parent=11 // pred_fallthru
        _
      // Predicated region
      $region21: #{res_conv_block_forward.1} parent=11 // pred_check
        %p168 = pneg %p100
      $region22: #{res_conv_block_forward.1} parent=11 // pred_check_branch
        %170 = sbr.rel (%p168) target = $region24
      $region23: #{res_conv_block_forward.1} parent=11 // pred_region
        _
      $region24: #{res_conv_block_forward.1} parent=11 // pred_fallthru
        _
      // Predicated region
      $region25: #{res_conv_block_forward.1} parent=11 // pred_check
        %p171 = pneg %p121
      $region26: #{res_conv_block_forward.1} parent=11 // pred_check_branch
        %173 = sbr.rel (%p171) target = $region28
      $region27: #{res_conv_block_forward.1} parent=11 // pred_region
        _
      $region28: #{res_conv_block_forward.1} parent=11 // pred_fallthru
        _
    $region12: #{res_conv_block_forward.1} parent=5 // pred_fallthru
      _
    %p174 = scmp.lt.s32.totalorder %s11, 2
    // Predicated region
    $region29: #{res_conv_block_forward.1} parent=5 // pred_check
      %p175 = pneg %p174
    $region30: #{res_conv_block_forward.1} parent=5 // pred_check_branch
      %177 = sbr.rel (%p175) target = $region32
    $region31: #{res_conv_block_forward.1} parent=5 // pred_region
      // Predicated region
      $region33: #{res_conv_block_forward.1} parent=31 // pred_check
        %p178 = pneg %p31
      $region34: #{res_conv_block_forward.1} parent=31 // pred_check_branch
        %180 = sbr.rel (%p178) target = $region36
      $region35: #{res_conv_block_forward.1} parent=31 // pred_region
        %p181 = scmp.lt.s32.totalorder %s11, 1
        %s182 = scalar_select %p181, %s11, 1
        %s183 = smul.addr %s182, 2
        %s184 = smul.addr %s183, 4
        %s185 = scalar_lea.vmem %s0, %s184
      $region36: #{res_conv_block_forward.1} parent=31 // pred_fallthru
        _
    $region32: #{res_conv_block_forward.1} parent=5 // pred_fallthru
      _
    %p186 = scmp.le.s32.totalorder 1, %s11
    %p187 = scmp.lt.s32.totalorder %s11, 3
    %p188 = pnand %p186, %p187
    %p189 = pneg %p188
    // Predicated region
    $region37: #{res_conv_block_forward.1} parent=5 // pred_check
      _
    $region38: #{res_conv_block_forward.1} parent=5 // pred_check_branch
      %191 = sbr.rel (%p188) target = $region40
    $region39: #{res_conv_block_forward.1} parent=5 // pred_region
      %s192 = ssub.s32 %s11, 1
      %p193 = scmp.lt.s32.totalorder %s16, 1
      %s194 = scalar_select %p193, %s16, 1
      %s195 = smul.addr %s194, 2
      %s196 = smul.addr %s195, 4
      %s197 = scalar_lea.vmem %s0, %s196
      %p198 = pneg %p37
      %p199 = pneg %p34
      %p200 = pneg %p58
      %p201 = pneg %p55
      %p202 = pneg %p79
      %p203 = pneg %p76
      %p204 = pneg %p100
      %p205 = pneg %p97
      %p206 = pneg %p121
      %p207 = pneg %p118
      %p208 = pneg %p147
      %p209 = pneg %p144
      %p210 = scmp.lt.s32.totalorder %s16, 1
      %s211 = scalar_select %p210, %s16, 1
      %s212 = smul.addr %s211, 2
      %s213 = smul.addr %s212, 8
      %s214 = scalar_lea.vmem %s5, %s213
      %p215 = scmp.lt.s32.totalorder %s16, 1
      %s216 = scalar_select %p215, %s16, 1
      %s217 = smul.addr %s216, 2
      %s218 = smul.addr %s217, 4
      %s219 = scalar_lea.vmem %s0, %s218
      %p220 = scmp.lt.s32.totalorder %s16, 1
      %s221 = scalar_select %p220, %s16, 1
      %s222 = smul.addr %s221, 2
      %s223 = smul.addr %s222, 8
      %s224 = scalar_lea.vmem %s5, %s223
      %v225 = vld [vmem:[%s219] sm:$0xff]
      %226 = vst [vmem:[#allocation2] sm:$0xff] 0.0
      %vm227 = vcmask 1043456
      %vm228 = vcmask 277508
      %vm229 = vmor %vm228, %vm227
      %230 = vst.msk [vmem:[#allocation2 + $0x8] sm:$0xff] %vm229, 0.0
      %v231 = vmax.f32 %v225, 0.0
      %232 = vst [vmem:[#allocation2 + $0x4] sm:$0xff] %v231
      %v233 = vlaneseq
      %v234 = vand.u32 %v233, 127
      %v235 = vadd.s32 %v234, 128
      %v236 = vand.u32 %v234, 15
      %v237 = vand.u32 %v235, 15
      %vm238 = vcmp.ge.s32.totalorder %v236, 2
      %vm239 = vcmp.ge.s32.totalorder %v237, 2
      %vm240 = vcmp.lt.s32.totalorder %v236, 18
      %vm241 = vcmp.lt.s32.totalorder %v237, 18
      %vm242 = vmand %vm238, %vm240
      %vm243 = vmand %vm239, %vm241
      %vm244 = vcmp.ge.s32.totalorder %v236, 1
      %vm245 = vcmp.ge.s32.totalorder %v237, 1
      %vm246 = vcmp.lt.s32.totalorder %v236, 17
      %vm247 = vcmp.lt.s32.totalorder %v237, 17
      %vm248 = vmand %vm244, %vm246
      %vm249 = vmand %vm245, %vm247
      %vm250 = vcmp.ge.s32.totalorder %v236, 4294967295
      %vm251 = vcmp.ge.s32.totalorder %v237, 4294967295
      %vm252 = vcmp.lt.s32.totalorder %v236, 15
      %vm253 = vcmp.lt.s32.totalorder %v237, 15
      %vm254 = vmand %vm250, %vm252
      %vm255 = vmand %vm251, %vm253
      %vm256 = vcmp.ge.s32.totalorder %v236, 4294967294
      %vm257 = vcmp.ge.s32.totalorder %v237, 4294967294
      %vm258 = vcmp.lt.s32.totalorder %v236, 14
      %vm259 = vcmp.lt.s32.totalorder %v237, 14
      %vm260 = vmand %vm256, %vm258
      %vm261 = vmand %vm257, %vm259
      %v262 = vld [vmem:[%s2] sm:$0xf]
      %264 = vset.pattern.permute.xlu0 0
      %265 = vperm.xlu0 %264, %v262
      %v266 = vpop.permute.xlu0 %265
      %v268 = vunpack.c.l.s4 839922192
      %v269 = vunpack.c.0.s8 %v268
      %v270 = vlaneseq
      %v271 = vshrl.u32 %v270, 7
      %v272 = vsub.s32 %v269, %v271
      %v273 = vrot.slane %v266, %v272
      %v275 = vadd.f32 %v225, %v273
      %v276 = vld [vmem:[#allocation2] sm:$0xff]
      %v277 = vld [vmem:[#allocation2 + $0x8] sm:$0xf]
      %v280 = vcombine.high %v276, %v276
      %281 = vrot.lane.b32.xlu0 %v276, 34
      %v282 = vpop.permute.xlu0 %281
      %283 = vrot.lane.b32.xlu0 %v280, 34
      %v284 = vpop.permute.xlu0 %283
      %285 = vrot.lane.b32.xlu0 %v277, 34
      %v286 = vpop.permute.xlu0 %285
      %vm287 = vcmask 277504
      %v288 = vsel %vm287, %v282, %v284
      %v289 = vsel %vm287, %v284, %v286
      %v292 = vsel %vm242, %v288, 0.0
      %v293 = vsel %vm243, %v289, 0.0
      %v294 = vld [vmem:[%s1] sm:$0xf]
      %296 = vset.pattern.permute.xlu0 0
      %297 = vperm.xlu0 %296, %v294
      %v298 = vpop.permute.xlu0 %297
      %v300 = vmul.f32 %v292, %v298
      %v301 = vmul.f32 %v293, %v298
      %v304 = vcombine.low %v300, %v301
      %v306 = vadd.f32 %v275, %v304
      %v307 = vld [vmem:[#allocation2] sm:$0xff]
      %v308 = vld [vmem:[#allocation2 + $0x8] sm:$0xf]
      %v311 = vcombine.high %v307, %v307
      %312 = vrot.lane.b32.xlu0 %v307, 33
      %v313 = vpop.permute.xlu0 %312
      %314 = vrot.lane.b32.xlu0 %v311, 33
      %v315 = vpop.permute.xlu0 %314
      %316 = vrot.lane.b32.xlu0 %v308, 33
      %v317 = vpop.permute.xlu0 %316
      %vm318 = vcmask 269312
      %v319 = vsel %vm318, %v313, %v315
      %v320 = vsel %vm318, %v315, %v317
      %v323 = vsel %vm248, %v319, 0.0
      %v324 = vsel %vm249, %v320, 0.0
      %v325 = vld [vmem:[%s1] sm:$0xf]
      %327 = vset.pattern.permute.xlu0 1
      %328 = vperm.xlu0 %327, %v325
      %v329 = vpop.permute.xlu0 %328
      %v331 = vmul.f32 %v323, %v329
      %v332 = vmul.f32 %v324, %v329
      %v335 = vcombine.low %v331, %v332
      %v337 = vadd.f32 %v306, %v335
      %v338 = vld [vmem:[#allocation2] sm:$0xff]
      %v339 = vld [vmem:[#allocation2 + $0x8] sm:$0xf]
      %v340 = vld [vmem:[%s1] sm:$0xf]
      %342 = vset.pattern.permute.xlu0 2
      %343 = vperm.xlu0 %342, %v340
      %v344 = vpop.permute.xlu0 %343
      %v346 = vunpack.c.l.s4 839922192
      %v347 = vunpack.c.0.s8 %v346
      %v348 = vlaneseq
      %v349 = vshrl.u32 %v348, 7
      %v350 = vsub.s32 %v347, %v349
      %v351 = vrot.slane %v344, %v350
      %v353 = vmul.f32 %v338, %v351
      %v354 = vmul.f32 %v339, %v351
      %357 = vrot.lane.b32.xlu0 %v353, 32
      %v358 = vpop.permute.xlu0 %357
      %359 = vrot.lane.b32.xlu0 %v354, 32
      %v360 = vpop.permute.xlu0 %359
      %v361 = vrot.slane %v358, 4
      %v362 = vrot.slane %v360, 4
      %v363 = vsel %vm227, %v361, %v362
      %vm364 = vcmask 261120
      %v365 = vsel %vm364, %v358, %v363
      %v367 = vadd.f32 %v337, %v365
      %v370 = vcombine.high %v338, %v338
      %371 = vrot.lane.b32.xlu0 %v338, 31
      %v372 = vpop.permute.xlu0 %371
      %373 = vrot.lane.b32.xlu0 %v370, 31
      %v374 = vpop.permute.xlu0 %373
      %375 = vrot.lane.b32.xlu0 %v339, 31
      %v376 = vpop.permute.xlu0 %375
      %vm377 = vcmask 252928
      %v378 = vsel %vm377, %v372, %v374
      %v379 = vsel %vm377, %v374, %v376
      %v382 = vsel %vm254, %v378, 0.0
      %v383 = vsel %vm255, %v379, 0.0
      %v384 = vld [vmem:[%s1] sm:$0xf]
      %386 = vset.pattern.permute.xlu0 3
      %387 = vperm.xlu0 %386, %v384
      %v388 = vpop.permute.xlu0 %387
      %v390 = vmul.f32 %v382, %v388
      %v391 = vmul.f32 %v383, %v388
      %v394 = vcombine.low %v390, %v391
      %v396 = vadd.f32 %v367, %v394
      %v397 = vld [vmem:[#allocation2] sm:$0xff]
      %v398 = vld [vmem:[#allocation2 + $0x8] sm:$0xf]
      %v401 = vcombine.high %v397, %v397
      %402 = vrot.lane.b32.xlu0 %v397, 30
      %v403 = vpop.permute.xlu0 %402
      %404 = vrot.lane.b32.xlu0 %v401, 30
      %v405 = vpop.permute.xlu0 %404
      %406 = vrot.lane.b32.xlu0 %v398, 30
      %v407 = vpop.permute.xlu0 %406
      %vm408 = vcmask 244736
      %v409 = vsel %vm408, %v403, %v405
      %v410 = vsel %vm408, %v405, %v407
      %v413 = vsel %vm260, %v409, 0.0
      %v414 = vsel %vm261, %v410, 0.0
      %v415 = vld [vmem:[%s1] sm:$0xf]
      %417 = vset.pattern.permute.xlu0 4
      %418 = vperm.xlu0 %417, %v415
      %v419 = vpop.permute.xlu0 %418
      %v421 = vmul.f32 %v413, %v419
      %v422 = vmul.f32 %v414, %v419
      %v425 = vcombine.low %v421, %v422
      %v427 = vadd.f32 %v396, %v425
      %v428 = vld [vmem:[#allocation2] sm:$0xff]
      %v429 = vld [vmem:[#allocation2 + $0x8] sm:$0xf]
      %v432 = vcombine.high %v428, %v428
      %433 = vrot.lane.b32.xlu0 %v428, 18
      %v434 = vpop.permute.xlu0 %433
      %435 = vrot.lane.b32.xlu0 %v432, 18
      %v436 = vpop.permute.xlu0 %435
      %437 = vrot.lane.b32.xlu0 %v429, 18
      %v438 = vpop.permute.xlu0 %437
      %vm439 = vcmask 146432
      %v440 = vsel %vm439, %v434, %v436
      %v441 = vsel %vm439, %v436, %v438
      %v444 = vsel %vm242, %v440, 0.0
      %v445 = vsel %vm243, %v441, 0.0
      %v446 = vld [vmem:[%s1] sm:$0xf]
      %448 = vset.pattern.permute.xlu0 5
      %449 = vperm.xlu0 %448, %v446
      %v450 = vpop.permute.xlu0 %449
      %v452 = vmul.f32 %v444, %v450
      %v453 = vmul.f32 %v445, %v450
      %v456 = vcombine.low %v452, %v453
      %v458 = vadd.f32 %v427, %v456
      %v459 = vld [vmem:[#allocation2] sm:$0xff]
      %v460 = vld [vmem:[#allocation2 + $0x8] sm:$0xf]
      %v463 = vcombine.high %v459, %v459
      %464 = vrot.lane.b32.xlu0 %v459, 17
      %v465 = vpop.permute.xlu0 %464
      %466 = vrot.lane.b32.xlu0 %v463, 17
      %v467 = vpop.permute.xlu0 %466
      %468 = vrot.lane.b32.xlu0 %v460, 17
      %v469 = vpop.permute.xlu0 %468
      %vm470 = vcmask 138240
      %v471 = vsel %vm470, %v465, %v467
      %v472 = vsel %vm470, %v467, %v469
      %v475 = vsel %vm248, %v471, 0.0
      %v476 = vsel %vm249, %v472, 0.0
      %v477 = vld [vmem:[%s1] sm:$0xf]
      %479 = vset.pattern.permute.xlu0 6
      %480 = vperm.xlu0 %479, %v477
      %v481 = vpop.permute.xlu0 %480
      %v483 = vmul.f32 %v475, %v481
      %v484 = vmul.f32 %v476, %v481
      %v487 = vcombine.low %v483, %v484
      %v489 = vadd.f32 %v458, %v487
      %v490 = vld [vmem:[#allocation2] sm:$0xff]
      %v491 = vld [vmem:[#allocation2 + $0x8] sm:$0xf]
      %v492 = vld [vmem:[%s1] sm:$0xf]
      %494 = vset.pattern.permute.xlu0 7
      %495 = vperm.xlu0 %494, %v492
      %v496 = vpop.permute.xlu0 %495
      %v498 = vunpack.c.l.s4 839922192
      %v499 = vunpack.c.0.s8 %v498
      %v500 = vlaneseq
      %v501 = vshrl.u32 %v500, 7
      %v502 = vsub.s32 %v499, %v501
      %v503 = vrot.slane %v496, %v502
      %v505 = vmul.f32 %v490, %v503
      %v506 = vmul.f32 %v491, %v503
      %509 = vrot.lane.b32.xlu0 %v505, 16
      %v510 = vpop.permute.xlu0 %509
      %511 = vrot.lane.b32.xlu0 %v506, 16
      %v512 = vpop.permute.xlu0 %511
      %v513 = vrot.slane %v510, 4
      %v514 = vrot.slane %v512, 4
      %v515 = vsel %vm227, %v513, %v514
      %vm516 = vcmask 130048
      %v517 = vsel %vm516, %v510, %v515
      %v519 = vadd.f32 %v489, %v517
      %v522 = vcombine.high %v490, %v490
      %523 = vrot.lane.b32.xlu0 %v490, 15
      %v524 = vpop.permute.xlu0 %523
      %525 = vrot.lane.b32.xlu0 %v522, 15
      %v526 = vpop.permute.xlu0 %525
      %527 = vrot.lane.b32.xlu0 %v491, 15
      %v528 = vpop.permute.xlu0 %527
      %vm529 = vcmask 121856
      %v530 = vsel %vm529, %v524, %v526
      %v531 = vsel %vm529, %v526, %v528
      %v534 = vsel %vm254, %v530, 0.0
      %v535 = vsel %vm255, %v531, 0.0
      %v536 = vld [vmem:[%s1] sm:$0xf]
      %538 = vset.pattern.permute.xlu0 8
      %539 = vperm.xlu0 %538, %v536
      %v540 = vpop.permute.xlu0 %539
      %v542 = vmul.f32 %v534, %v540
      %v543 = vmul.f32 %v535, %v540
      %v546 = vcombine.low %v542, %v543
      %v548 = vadd.f32 %v519, %v546
      %v549 = vld [vmem:[#allocation2] sm:$0xff]
      %v550 = vld [vmem:[#allocation2 + $0x8] sm:$0xf]
      %v553 = vcombine.high %v549, %v549
      %554 = vrot.lane.b32.xlu0 %v549, 14
      %v555 = vpop.permute.xlu0 %554
      %556 = vrot.lane.b32.xlu0 %v553, 14
      %v557 = vpop.permute.xlu0 %556
      %558 = vrot.lane.b32.xlu0 %v550, 14
      %v559 = vpop.permute.xlu0 %558
      %vm560 = vcmask 113664
      %v561 = vsel %vm560, %v555, %v557
      %v562 = vsel %vm560, %v557, %v559
      %v565 = vsel %vm260, %v561, 0.0
      %v566 = vsel %vm261, %v562, 0.0
      %v567 = vld [vmem:[%s1] sm:$0xf]
      %569 = vset.pattern.permute.xlu0 9
      %570 = vperm.xlu0 %569, %v567
      %v571 = vpop.permute.xlu0 %570
      %v573 = vmul.f32 %v565, %v571
      %v574 = vmul.f32 %v566, %v571
      %v577 = vcombine.low %v573, %v574
      %v579 = vadd.f32 %v548, %v577
      %v580 = vld [vmem:[#allocation2] sm:$0xff]
      %v581 = vld [vmem:[#allocation2 + $0x8] sm:$0xf]
      %v584 = vcombine.high %v580, %v580
      %585 = vrot.lane.b32.xlu0 %v580, 2
      %v586 = vpop.permute.xlu0 %585
      %587 = vrot.lane.b32.xlu0 %v584, 2
      %v588 = vpop.permute.xlu0 %587
      %589 = vrot.lane.b32.xlu0 %v581, 2
      %v590 = vpop.permute.xlu0 %589
      %vm591 = vcmask 15360
      %v592 = vsel %vm591, %v586, %v588
      %v593 = vsel %vm591, %v588, %v590
      %v596 = vsel %vm242, %v592, 0.0
      %v597 = vsel %vm243, %v593, 0.0
      %v598 = vld [vmem:[%s1] sm:$0xf]
      %600 = vset.pattern.permute.xlu0 10
      %601 = vperm.xlu0 %600, %v598
      %v602 = vpop.permute.xlu0 %601
      %v604 = vmul.f32 %v596, %v602
      %v605 = vmul.f32 %v597, %v602
      %v608 = vcombine.low %v604, %v605
      %v610 = vadd.f32 %v579, %v608
      %v611 = vld [vmem:[#allocation2] sm:$0xff]
      %v612 = vld [vmem:[#allocation2 + $0x8] sm:$0xf]
      %v615 = vcombine.high %v611, %v611
      %616 = vrot.lane.b32.xlu0 %v611, 1
      %v617 = vpop.permute.xlu0 %616
      %618 = vrot.lane.b32.xlu0 %v615, 1
      %v619 = vpop.permute.xlu0 %618
      %620 = vrot.lane.b32.xlu0 %v612, 1
      %v621 = vpop.permute.xlu0 %620
      %vm622 = vcmask 7168
      %v623 = vsel %vm622, %v617, %v619
      %v624 = vsel %vm622, %v619, %v621
      %v627 = vsel %vm248, %v623, 0.0
      %v628 = vsel %vm249, %v624, 0.0
      %v629 = vld [vmem:[%s1] sm:$0xf]
      %631 = vset.pattern.permute.xlu0 11
      %632 = vperm.xlu0 %631, %v629
      %v633 = vpop.permute.xlu0 %632
      %v635 = vmul.f32 %v627, %v633
      %v636 = vmul.f32 %v628, %v633
      %v639 = vcombine.low %v635, %v636
      %v641 = vadd.f32 %v610, %v639
      %v642 = vld [vmem:[#allocation2 + $0x4] sm:$0xff]
      %v643 = vld [vmem:[%s1] sm:$0xf]
      %645 = vset.pattern.permute.xlu0 12
      %646 = vperm.xlu0 %645, %v643
      %v647 = vpop.permute.xlu0 %646
      %v649 = vunpack.c.l.s4 839922192
      %v650 = vunpack.c.0.s8 %v649
      %v651 = vlaneseq
      %v652 = vshrl.u32 %v651, 7
      %v653 = vsub.s32 %v650, %v652
      %v654 = vrot.slane %v647, %v653
      %v656 = vmul.f32 %v642, %v654
      %v657 = vadd.f32 %v641, %v656
      %v658 = vld [vmem:[#allocation2 + $0x4] sm:$0xff]
      %v659 = vld [vmem:[#allocation2 + $0xc] sm:$0xf]
      %v662 = vcombine.high %v658, %v658
      %663 = vrot.lane.b32.xlu0 %v658, 127
      %v664 = vpop.permute.xlu0 %663
      %665 = vrot.lane.b32.xlu0 %v662, 127
      %v666 = vpop.permute.xlu0 %665
      %667 = vrot.lane.b32.xlu0 %v659, 127
      %v668 = vpop.permute.xlu0 %667
      %vm669 = vcmask 1039360
      %v670 = vsel %vm669, %v664, %v666
      %v671 = vsel %vm669, %v666, %v668
      %v674 = vsel %vm254, %v670, 0.0
      %v675 = vsel %vm255, %v671, 0.0
      %v676 = vld [vmem:[%s1] sm:$0xf]
      %678 = vset.pattern.permute.xlu0 13
      %679 = vperm.xlu0 %678, %v676
      %v680 = vpop.permute.xlu0 %679
      %v682 = vmul.f32 %v674, %v680
      %v683 = vmul.f32 %v675, %v680
      %v686 = vcombine.low %v682, %v683
      %v688 = vadd.f32 %v657, %v686
      %v689 = vld [vmem:[#allocation2 + $0x4] sm:$0xff]
      %v690 = vld [vmem:[#allocation2 + $0xc] sm:$0xf]
      %v693 = vcombine.high %v689, %v689
      %694 = vrot.lane.b32.xlu0 %v689, 126
      %v695 = vpop.permute.xlu0 %694
      %696 = vrot.lane.b32.xlu0 %v693, 126
      %v697 = vpop.permute.xlu0 %696
      %698 = vrot.lane.b32.xlu0 %v690, 126
      %v699 = vpop.permute.xlu0 %698
      %vm700 = vcmask 1031168
      %v701 = vsel %vm700, %v695, %v697
      %v702 = vsel %vm700, %v697, %v699
      %v705 = vsel %vm260, %v701, 0.0
      %v706 = vsel %vm261, %v702, 0.0
      %v707 = vld [vmem:[%s1] sm:$0xf]
      %709 = vset.pattern.permute.xlu0 14
      %710 = vperm.xlu0 %709, %v707
      %v711 = vpop.permute.xlu0 %710
      %v713 = vmul.f32 %v705, %v711
      %v714 = vmul.f32 %v706, %v711
      %v717 = vcombine.low %v713, %v714
      %v719 = vadd.f32 %v688, %v717
      %v720 = vld [vmem:[#allocation2 + $0x4] sm:$0xff]
      %v721 = vld [vmem:[#allocation2 + $0xc] sm:$0xf]
      %v724 = vcombine.high %v720, %v720
      %725 = vrot.lane.b32.xlu0 %v720, 114
      %v726 = vpop.permute.xlu0 %725
      %727 = vrot.lane.b32.xlu0 %v724, 114
      %v728 = vpop.permute.xlu0 %727
      %729 = vrot.lane.b32.xlu0 %v721, 114
      %v730 = vpop.permute.xlu0 %729
      %vm731 = vcmask 932864
      %v732 = vsel %vm731, %v726, %v728
      %v733 = vsel %vm731, %v728, %v730
      %v736 = vsel %vm242, %v732, 0.0
      %v737 = vsel %vm243, %v733, 0.0
      %v738 = vld [vmem:[%s1] sm:$0xf]
      %740 = vset.pattern.permute.xlu0 15
      %741 = vperm.xlu0 %740, %v738
      %v742 = vpop.permute.xlu0 %741
      %v744 = vmul.f32 %v736, %v742
      %v745 = vmul.f32 %v737, %v742
      %v748 = vcombine.low %v744, %v745
      %v750 = vadd.f32 %v719, %v748
      %v751 = vld [vmem:[#allocation2 + $0x4] sm:$0xff]
      %v752 = vld [vmem:[#allocation2 + $0xc] sm:$0xf]
      %v755 = vcombine.high %v751, %v751
      %756 = vrot.lane.b32.xlu0 %v751, 113
      %v757 = vpop.permute.xlu0 %756
      %758 = vrot.lane.b32.xlu0 %v755, 113
      %v759 = vpop.permute.xlu0 %758
      %760 = vrot.lane.b32.xlu0 %v752, 113
      %v761 = vpop.permute.xlu0 %760
      %vm762 = vcmask 924672
      %v763 = vsel %vm762, %v757, %v759
      %v764 = vsel %vm762, %v759, %v761
      %v767 = vsel %vm248, %v763, 0.0
      %v768 = vsel %vm249, %v764, 0.0
      %v769 = vld [vmem:[%s1] sm:$0xf]
      %771 = vset.pattern.permute.xlu0 16
      %772 = vperm.xlu0 %771, %v769
      %v773 = vpop.permute.xlu0 %772
      %v775 = vmul.f32 %v767, %v773
      %v776 = vmul.f32 %v768, %v773
      %v779 = vcombine.low %v775, %v776
      %v781 = vadd.f32 %v750, %v779
      %v782 = vld [vmem:[#allocation2 + $0x4] sm:$0xff]
      %v783 = vld [vmem:[#allocation2 + $0xc] sm:$0xf]
      %v784 = vld [vmem:[%s1] sm:$0xf]
      %786 = vset.pattern.permute.xlu0 17
      %787 = vperm.xlu0 %786, %v784
      %v788 = vpop.permute.xlu0 %787
      %v790 = vunpack.c.l.s4 839922192
      %v791 = vunpack.c.0.s8 %v790
      %v792 = vlaneseq
      %v793 = vshrl.u32 %v792, 7
      %v794 = vsub.s32 %v791, %v793
      %v795 = vrot.slane %v788, %v794
      %v797 = vmul.f32 %v782, %v795
      %v798 = vmul.f32 %v783, %v795
      %801 = vrot.lane.b32.xlu0 %v797, 112
      %v802 = vpop.permute.xlu0 %801
      %803 = vrot.lane.b32.xlu0 %v798, 112
      %v804 = vpop.permute.xlu0 %803
      %v805 = vrot.slane %v802, 4
      %v806 = vrot.slane %v804, 4
      %v807 = vsel %vm227, %v805, %v806
      %vm808 = vcmask 916480
      %v809 = vsel %vm808, %v802, %v807
      %v811 = vadd.f32 %v781, %v809
      %v814 = vcombine.high %v782, %v782
      %815 = vrot.lane.b32.xlu0 %v782, 111
      %v816 = vpop.permute.xlu0 %815
      %817 = vrot.lane.b32.xlu0 %v814, 111
      %v818 = vpop.permute.xlu0 %817
      %819 = vrot.lane.b32.xlu0 %v783, 111
      %v820 = vpop.permute.xlu0 %819
      %vm821 = vcmask 908288
      %v822 = vsel %vm821, %v816, %v818
      %v823 = vsel %vm821, %v818, %v820
      %v826 = vsel %vm254, %v822, 0.0
      %v827 = vsel %vm255, %v823, 0.0
      %v828 = vld [vmem:[%s1] sm:$0xf]
      %830 = vset.pattern.permute.xlu0 18
      %831 = vperm.xlu0 %830, %v828
      %v832 = vpop.permute.xlu0 %831
      %v834 = vmul.f32 %v826, %v832
      %v835 = vmul.f32 %v827, %v832
      %v838 = vcombine.low %v834, %v835
      %v840 = vadd.f32 %v811, %v838
      %v841 = vld [vmem:[#allocation2 + $0x4] sm:$0xff]
      %v842 = vld [vmem:[#allocation2 + $0xc] sm:$0xf]
      %v845 = vcombine.high %v841, %v841
      %846 = vrot.lane.b32.xlu0 %v841, 110
      %v847 = vpop.permute.xlu0 %846
      %848 = vrot.lane.b32.xlu0 %v845, 110
      %v849 = vpop.permute.xlu0 %848
      %850 = vrot.lane.b32.xlu0 %v842, 110
      %v851 = vpop.permute.xlu0 %850
      %vm852 = vcmask 900096
      %v853 = vsel %vm852, %v847, %v849
      %v854 = vsel %vm852, %v849, %v851
      %v857 = vsel %vm260, %v853, 0.0
      %v858 = vsel %vm261, %v854, 0.0
      %v859 = vld [vmem:[%s1] sm:$0xf]
      %861 = vset.pattern.permute.xlu0 19
      %862 = vperm.xlu0 %861, %v859
      %v863 = vpop.permute.xlu0 %862
      %v865 = vmul.f32 %v857, %v863
      %v866 = vmul.f32 %v858, %v863
      %v869 = vcombine.low %v865, %v866
      %v871 = vadd.f32 %v840, %v869
      %v872 = vld [vmem:[#allocation2 + $0x4] sm:$0xff]
      %v873 = vld [vmem:[#allocation2 + $0xc] sm:$0xf]
      %v876 = vcombine.high %v872, %v872
      %877 = vrot.lane.b32.xlu0 %v872, 98
      %v878 = vpop.permute.xlu0 %877
      %879 = vrot.lane.b32.xlu0 %v876, 98
      %v880 = vpop.permute.xlu0 %879
      %881 = vrot.lane.b32.xlu0 %v873, 98
      %v882 = vpop.permute.xlu0 %881
      %vm883 = vcmask 801792
      %v884 = vsel %vm883, %v878, %v880
      %v885 = vsel %vm883, %v880, %v882
      %v888 = vsel %vm242, %v884, 0.0
      %v889 = vsel %vm243, %v885, 0.0
      %v890 = vld [vmem:[%s1] sm:$0xf]
      %892 = vset.pattern.permute.xlu0 20
      %893 = vperm.xlu0 %892, %v890
      %v894 = vpop.permute.xlu0 %893
      %v896 = vmul.f32 %v888, %v894
      %v897 = vmul.f32 %v889, %v894
      %v900 = vcombine.low %v896, %v897
      %v902 = vadd.f32 %v871, %v900
      %v903 = vld [vmem:[#allocation2 + $0x4] sm:$0xff]
      %v904 = vld [vmem:[#allocation2 + $0xc] sm:$0xf]
      %v907 = vcombine.high %v903, %v903
      %908 = vrot.lane.b32.xlu0 %v903, 97
      %v909 = vpop.permute.xlu0 %908
      %910 = vrot.lane.b32.xlu0 %v907, 97
      %v911 = vpop.permute.xlu0 %910
      %912 = vrot.lane.b32.xlu0 %v904, 97
      %v913 = vpop.permute.xlu0 %912
      %vm914 = vcmask 793600
      %v915 = vsel %vm914, %v909, %v911
      %v916 = vsel %vm914, %v911, %v913
      %v919 = vsel %vm248, %v915, 0.0
      %v920 = vsel %vm249, %v916, 0.0
      %v921 = vld [vmem:[%s1] sm:$0xf]
      %923 = vset.pattern.permute.xlu0 21
      %924 = vperm.xlu0 %923, %v921
      %v925 = vpop.permute.xlu0 %924
      %v927 = vmul.f32 %v919, %v925
      %v928 = vmul.f32 %v920, %v925
      %v931 = vcombine.low %v927, %v928
      %v933 = vadd.f32 %v902, %v931
      %v934 = vld [vmem:[#allocation2 + $0x4] sm:$0xff]
      %v935 = vld [vmem:[#allocation2 + $0xc] sm:$0xf]
      %v936 = vld [vmem:[%s1] sm:$0xf]
      %938 = vset.pattern.permute.xlu0 22
      %939 = vperm.xlu0 %938, %v936
      %v940 = vpop.permute.xlu0 %939
      %v942 = vunpack.c.l.s4 839922192
      %v943 = vunpack.c.0.s8 %v942
      %v944 = vlaneseq
      %v945 = vshrl.u32 %v944, 7
      %v946 = vsub.s32 %v943, %v945
      %v947 = vrot.slane %v940, %v946
      %v949 = vmul.f32 %v934, %v947
      %v950 = vmul.f32 %v935, %v947
      %953 = vrot.lane.b32.xlu0 %v949, 96
      %v954 = vpop.permute.xlu0 %953
      %955 = vrot.lane.b32.xlu0 %v950, 96
      %v956 = vpop.permute.xlu0 %955
      %v957 = vrot.slane %v954, 4
      %v958 = vrot.slane %v956, 4
      %v959 = vsel %vm227, %v957, %v958
      %vm960 = vcmask 785408
      %v961 = vsel %vm960, %v954, %v959
      %v963 = vadd.f32 %v933, %v961
      %v966 = vcombine.high %v934, %v934
      %967 = vrot.lane.b32.xlu0 %v934, 95
      %v968 = vpop.permute.xlu0 %967
      %969 = vrot.lane.b32.xlu0 %v966, 95
      %v970 = vpop.permute.xlu0 %969
      %971 = vrot.lane.b32.xlu0 %v935, 95
      %v972 = vpop.permute.xlu0 %971
      %vm973 = vcmask 777216
      %v974 = vsel %vm973, %v968, %v970
      %v975 = vsel %vm973, %v970, %v972
      %v978 = vsel %vm254, %v974, 0.0
      %v979 = vsel %vm255, %v975, 0.0
      %v980 = vld [vmem:[%s1] sm:$0xf]
      %982 = vset.pattern.permute.xlu0 23
      %983 = vperm.xlu0 %982, %v980
      %v984 = vpop.permute.xlu0 %983
      %v986 = vmul.f32 %v978, %v984
      %v987 = vmul.f32 %v979, %v984
      %v990 = vcombine.low %v986, %v987
      %v992 = vadd.f32 %v963, %v990
      %v993 = vld [vmem:[#allocation2 + $0x4] sm:$0xff]
      %v994 = vld [vmem:[#allocation2 + $0xc] sm:$0xf]
      %v997 = vcombine.high %v993, %v993
      %998 = vrot.lane.b32.xlu0 %v993, 94
      %v999 = vpop.permute.xlu0 %998
      %1000 = vrot.lane.b32.xlu0 %v997, 94
      %v1001 = vpop.permute.xlu0 %1000
      %1002 = vrot.lane.b32.xlu0 %v994, 94
      %v1003 = vpop.permute.xlu0 %1002
      %vm1004 = vcmask 769024
      %v1005 = vsel %vm1004, %v999, %v1001
      %v1006 = vsel %vm1004, %v1001, %v1003
      %v1009 = vsel %vm260, %v1005, 0.0
      %v1010 = vsel %vm261, %v1006, 0.0
      %v1011 = vld [vmem:[%s1] sm:$0xf]
      %1013 = vset.pattern.permute.xlu0 24
      %1014 = vperm.xlu0 %1013, %v1011
      %v1015 = vpop.permute.xlu0 %1014
      %v1017 = vmul.f32 %v1009, %v1015
      %v1018 = vmul.f32 %v1010, %v1015
      %v1021 = vcombine.low %v1017, %v1018
      %v1023 = vadd.f32 %v992, %v1021
      %v1024 = vld [vmem:[%s4] sm:$0xff]
      %1026 = vset.pattern.permute.xlu0 0
      %1027 = vperm.xlu0 %1026, %v1024
      %v1028 = vpop.permute.xlu0 %1027
      %v1030 = vadd.f32 %v1028, 0.0
      %v1031 = vld [vmem:[%s3] sm:$0xff]
      %1033 = vset.pattern.permute.xlu0 0
      %1034 = vperm.xlu0 %1033, %v1031
      %v1035 = vpop.permute.xlu0 %1034
      %v1038 = vlaneseq
      %v1039 = vshrl.u32 %v1038, 7
      %v1040 = vsub.s32 0, %v1039
      %v1041 = vrot.slane %v1023, %v1040
      %v1042 = vlaneseq
      %v1043 = vshrl.u32 %v1042, 7
      %v1044 = vsub.s32 4, %v1043
      %v1045 = vrot.slane %v1023, %v1044
      %v1048 = vlaneseq
      %v1049 = vshrl.u32 %v1048, 7
      %v1050 = vsub.s32 0, %v1049
      %v1051 = vrot.slane %v1041, %v1050
      %v1052 = vlaneseq
      %v1053 = vshrl.u32 %v1052, 7
      %v1054 = vsub.s32 0, %v1053
      %v1055 = vrot.slane %v1045, %v1054
      %v1056 = vmul.f32 %v1035, %v1051
      %v1057 = vmul.f32 %v1035, %v1055
      %v1058 = vadd.f32 %v1030, %v1056
      %v1059 = vadd.f32 %v1030, %v1057
      %1060 = vset.pattern.permute.xlu0 1
      %1061 = vperm.xlu0 %1060, %v1031
      %v1062 = vpop.permute.xlu0 %1061
      %v1064 = vlaneseq
      %v1065 = vshrl.u32 %v1064, 7
      %v1066 = vsub.s32 1, %v1065
      %v1067 = vrot.slane %v1023, %v1066
      %v1068 = vlaneseq
      %v1069 = vshrl.u32 %v1068, 7
      %v1070 = vsub.s32 5, %v1069
      %v1071 = vrot.slane %v1023, %v1070
      %v1074 = vlaneseq
      %v1075 = vshrl.u32 %v1074, 7
      %v1076 = vsub.s32 1, %v1075
      %v1077 = vrot.slane %v1067, %v1076
      %v1078 = vlaneseq
      %v1079 = vshrl.u32 %v1078, 7
      %v1080 = vsub.s32 1, %v1079
      %v1081 = vrot.slane %v1071, %v1080
      %v1082 = vmul.f32 %v1062, %v1077
      %v1083 = vmul.f32 %v1062, %v1081
      %v1084 = vadd.f32 %v1058, %v1082
      %v1085 = vadd.f32 %v1059, %v1083
      %1086 = vset.pattern.permute.xlu0 2
      %1087 = vperm.xlu0 %1086, %v1031
      %v1088 = vpop.permute.xlu0 %1087
      %v1090 = vlaneseq
      %v1091 = vshrl.u32 %v1090, 7
      %v1092 = vsub.s32 2, %v1091
      %v1093 = vrot.slane %v1023, %v1092
      %v1094 = vlaneseq
      %v1095 = vshrl.u32 %v1094, 7
      %v1096 = vsub.s32 6, %v1095
      %v1097 = vrot.slane %v1023, %v1096
      %v1100 = vlaneseq
      %v1101 = vshrl.u32 %v1100, 7
      %v1102 = vsub.s32 2, %v1101
      %v1103 = vrot.slane %v1093, %v1102
      %v1104 = vlaneseq
      %v1105 = vshrl.u32 %v1104, 7
      %v1106 = vsub.s32 2, %v1105
      %v1107 = vrot.slane %v1097, %v1106
      %v1108 = vmul.f32 %v1088, %v1103
      %v1109 = vmul.f32 %v1088, %v1107
      %v1110 = vadd.f32 %v1084, %v1108
      %v1111 = vadd.f32 %v1085, %v1109
      %1112 = vset.pattern.permute.xlu0 3
      %1113 = vperm.xlu0 %1112, %v1031
      %v1114 = vpop.permute.xlu0 %1113
      %v1116 = vlaneseq
      %v1117 = vshrl.u32 %v1116, 7
      %v1118 = vsub.s32 3, %v1117
      %v1119 = vrot.slane %v1023, %v1118
      %v1120 = vlaneseq
      %v1121 = vshrl.u32 %v1120, 7
      %v1122 = vsub.s32 7, %v1121
      %v1123 = vrot.slane %v1023, %v1122
      %v1126 = vlaneseq
      %v1127 = vshrl.u32 %v1126, 7
      %v1128 = vsub.s32 3, %v1127
      %v1129 = vrot.slane %v1119, %v1128
      %v1130 = vlaneseq
      %v1131 = vshrl.u32 %v1130, 7
      %v1132 = vsub.s32 3, %v1131
      %v1133 = vrot.slane %v1123, %v1132
      %v1134 = vmul.f32 %v1114, %v1129
      %v1135 = vmul.f32 %v1114, %v1133
      %v1136 = vadd.f32 %v1110, %v1134
      %v1137 = vadd.f32 %v1111, %v1135
      %1138 = vst [vmem:[%s224] sm:$0xff] %v1136
      %1139 = vst [vmem:[%s224 + $0x8] sm:$0xff] %v1137
      %p1140 = scmp.lt.s32.totalorder %s16, 1
      %s1141 = scalar_select %p1140, %s16, 1
      %s1142 = smul.addr %s1141, 2
      %s1143 = smul.addr %s1142, 8
      %s1144 = scalar_lea.vmem %s5, %s1143
      // Predicated region
      $region41: #{res_conv_block_forward.1} parent=39 // pred_check
        %p1145 = pneg %p144
      $region42: #{res_conv_block_forward.1} parent=39 // pred_check_branch
        %1147 = sbr.rel (%p1145) target = $region44
      $region43: #{res_conv_block_forward.1} parent=39 // pred_region
        _
      $region44: #{res_conv_block_forward.1} parent=39 // pred_fallthru
        _
    $region40: #{res_conv_block_forward.1} parent=5 // pred_fallthru
      _
    %p1148 = scmp.le.s32.totalorder 2, %s11
    // Predicated region
    $region45: #{res_conv_block_forward.1} parent=5 // pred_check
      %p1149 = pneg %p1148
    $region46: #{res_conv_block_forward.1} parent=5 // pred_check_branch
      %1151 = sbr.rel (%p1149) target = $region48
    $region47: #{res_conv_block_forward.1} parent=5 // pred_region
      %s1152 = ssub.s32 %s11, 2
      // Predicated region
      $region49: #{res_conv_block_forward.1} parent=47 // pred_check
        %p1153 = pneg %p150
      $region50: #{res_conv_block_forward.1} parent=47 // pred_check_branch
        %1155 = sbr.rel (%p1153) target = $region52
      $region51: #{res_conv_block_forward.1} parent=47 // pred_region
        %p1156 = scmp.lt.s32.totalorder %s17, 1
        %s1157 = scalar_select %p1156, %s17, 1
        %s1158 = smul.addr %s1157, 2
        %s1159 = smul.addr %s1158, 8
        %s1160 = scalar_lea.vmem %s5, %s1159
      $region52: #{res_conv_block_forward.1} parent=47 // pred_fallthru
        _
    $region48: #{res_conv_block_forward.1} parent=5 // pred_fallthru
      _
  $region6: #{res_conv_block_forward.1} parent=0 // loop_footer
    %s15 = sadd.s32 1, %s11
  $region7: #{res_conv_block_forward.1} parent=0 // loop_footer_branch
    %10 = sbr.rel target = $region3
  $region8: #{res_conv_block_forward.1} parent=0 // loop_exit
    _

</llo_original>
